<compile_context>
chip_gen: v6e
topology: v6e:2x2x1
jax: 0.10.0
libtpu: 0.0.40
codegen_flags: <defaults>
</compile_context>

<pallas_src>
import functools

import jax
import jax.numpy as jnp
from jax.experimental import pallas as pl
from jax.experimental.pallas import tpu as pltpu

_LANE = 128
_NEG_BIG = -1e30          # padded-class logit bias; finite (kept f32) so onehot*logit stays 0
_MAX_TILE_B = 1024        # review: 512-1024 amortizes per-step overhead (~0.35 us)
_STREAM_VMEM_BUDGET = 12 * 1024 * 1024   # stay under v5e's 16 MiB default scoped VMEM


def _round_up(x, m):
    return ((x + m - 1) // m) * m


def span_cls_kernel(acc_ref, gyr_ref, w1a_ref, w1g_ref, b1_ref, w2_ref, b2_ref,
                    lab_ref, out_ref, *, tile_b, valid_rows, mask_tail):
    # --- model: Linear + ReLU.  concat(xa, xg) @ W1 == xa @ W1[:48] + xg @ W1[48:]
    h = jnp.dot(acc_ref[...], w1a_ref[...], preferred_element_type=jnp.float32)
    h = h + jnp.dot(gyr_ref[...], w1g_ref[...], preferred_element_type=jnp.float32)
    h = jnp.maximum(h + b1_ref[...], 0.0)                           # [tile_b, H_pad] f32

    # --- head: linear classifier ---
    logits = jnp.dot(h.astype(w2_ref.dtype), w2_ref[...],
                     preferred_element_type=jnp.float32)            # [tile_b, NC_pad]
    logits = logits + b2_ref[...]            # padded classes biased to -1e30 (f32)

    # --- CrossEntropyLoss on label[:, 0] ---
    m = jnp.max(logits, axis=-1, keepdims=True)
    lse = m + jnp.log(jnp.sum(jnp.exp(logits - m), axis=-1, keepdims=True))
    cls_idx = jax.lax.broadcasted_iota(jnp.int32, logits.shape, 1)
    onehot = (cls_idx == lab_ref[...]).astype(jnp.float32)
    picked = jnp.sum(logits * onehot, axis=-1, keepdims=True)       # [tile_b, 1]
    per_row = lse - picked

    if mask_tail:  # only compiled in when B is not a multiple of tile_b
        row = pl.program_id(0) * tile_b + jax.lax.broadcasted_iota(
            jnp.int32, (tile_b, 1), 0)
        per_row = per_row * (row < valid_rows).astype(jnp.float32)

    partial = jnp.sum(per_row)                                      # scalar
    # lane-dense per-tile partial; wrapper reduces with sum(partials[:, 0]) / B
    out_ref[...] = jnp.zeros_like(out_ref) + partial


def span_cls_loss(acc, gyr, label, w1, b1, w2, b2, *,
                  operand_dtype=jnp.bfloat16, tile_b=None):
    """Scalar mean cross-entropy loss, matching SpanCLSStrategy.forward."""
    B, C, T = acc.shape
    CT = C * T                 # per-stream flattened feature dim
    H = w1.shape[1]
    NC = w2.shape[1]

    H_pad = _round_up(H, _LANE)
    NC_pad = _round_up(NC, _LANE)

    itemsize = jnp.dtype(operand_dtype).itemsize
    sub = 16 if itemsize == 2 else 8          # bf16 packs 2 rows / sublane

    if tile_b is None:
        # VMEM-derived cap: double-buffered acc+gyr tiles + int32 labels per row.
        per_row_bytes = 2 * (2 * CT * itemsize) + 2 * 4
        cap = max(sub, (_STREAM_VMEM_BUDGET // per_row_bytes) // sub * sub)
        tile_b = min(_round_up(B, sub), _MAX_TILE_B, cap)
    tile_b = _round_up(tile_b, sub)
    B_pad = _round_up(B, tile_b)
    num_tiles = B_pad // tile_b

    f32 = jnp.float32
    # No concat / feature-padding slab: just a (free) flattening reshape + dtype cast.
    # In a real pipeline the upstream activations would already be bf16 in HBM.
    acc2 = acc.reshape(B, CT).astype(operand_dtype)
    gyr2 = gyr.reshape(B, CT).astype(operand_dtype)
    lab = label[:, 0].astype(jnp.int32).reshape(B, 1)
    if B_pad != B:             # only a small tail pad, never a full re-materialization
        acc2 = jnp.pad(acc2, ((0, B_pad - B), (0, 0)))
        gyr2 = jnp.pad(gyr2, ((0, B_pad - B), (0, 0)))
        lab = jnp.pad(lab, ((0, B_pad - B), (0, 0)))

    w1a = jnp.pad(w1[:CT].astype(f32), ((0, 0), (0, H_pad - H))).astype(operand_dtype)
    w1g = jnp.pad(w1[CT:].astype(f32), ((0, 0), (0, H_pad - H))).astype(operand_dtype)
    b1p = jnp.pad(b1.astype(f32).reshape(1, H), ((0, 0), (0, H_pad - H)))
    w2p = jnp.pad(w2.astype(f32),
                  ((0, H_pad - H), (0, NC_pad - NC))).astype(operand_dtype)
    # b2p must stay f32: -1e30 in a narrower dtype would become -inf -> NaN in pick.
    b2p = jnp.pad(b2.astype(f32).reshape(1, NC), ((0, 0), (0, NC_pad - NC)),
                  constant_values=_NEG_BIG)

    kernel = functools.partial(span_cls_kernel, tile_b=tile_b,
                               valid_rows=B, mask_tail=(B_pad != B))

    partials = pl.pallas_call(
        kernel,
        out_shape=jax.ShapeDtypeStruct((num_tiles, _LANE), jnp.float32),
        grid=(num_tiles,),
        in_specs=[
            pl.BlockSpec((tile_b, CT), lambda i: (i, 0)),      # acc stream
            pl.BlockSpec((tile_b, CT), lambda i: (i, 0)),      # gyr stream
            pl.BlockSpec((CT, H_pad), lambda i: (0, 0)),       # W1 rows for acc (resident)
            pl.BlockSpec((CT, H_pad), lambda i: (0, 0)),       # W1 rows for gyr (resident)
            pl.BlockSpec((1, H_pad), lambda i: (0, 0)),        # b1
            pl.BlockSpec((H_pad, NC_pad), lambda i: (0, 0)),   # W2 (resident)
            pl.BlockSpec((1, NC_pad), lambda i: (0, 0)),       # b2 (-1e30 padded, f32)
            pl.BlockSpec((tile_b, 1), lambda i: (i, 0)),       # labels
        ],
        out_specs=pl.BlockSpec((1, _LANE), lambda i: (i, 0)),  # per-tile partial sums
        compiler_params=pltpu.CompilerParams(
            dimension_semantics=("parallel",)),                # no cross-step carry
    )(acc2, gyr2, w1a, w1g, b1p, w2p, b2p, lab)

    return jnp.sum(partials[:, 0]) * (1.0 / B)


def make_params(key, in_dim, hidden, num_classes):
    k1, k2 = jax.random.split(key)
    w1 = (jax.random.normal(k1, (in_dim, hidden), jnp.float32)
          / jnp.sqrt(jnp.float32(in_dim)))
    b1 = jnp.zeros((1, hidden), jnp.float32)
    w2 = (jax.random.normal(k2, (hidden, num_classes), jnp.float32)
          / jnp.sqrt(jnp.float32(hidden)))
    b2 = jnp.zeros((1, num_classes), jnp.float32)
    return w1, b1, w2, b2


if __name__ == "__main__":
    B, C, T = 24, 3, 16         # batch, IMU channels, time steps
    H, NC = 32, 10              # hidden width, number of classes
    D = 2 * C * T               # concatenated feature dim (96)

    key = jax.random.PRNGKey(0)
    k_acc, k_gyr, k_lab, k_par = jax.random.split(key, 4)

    acc = jax.random.normal(k_acc, (B, C, T), jnp.float32)
    gyr = jax.random.normal(k_gyr, (B, C, T), jnp.float32)
    label = jax.random.randint(k_lab, (B, 2), 0, NC, jnp.int32)  # forward uses label[:, 0]
    w1, b1, w2, b2 = make_params(k_par, D, H, NC)

    # pure-JAX reference
    x = jnp.concatenate([acc.reshape(B, -1), gyr.reshape(B, -1)], axis=-1)
    h = jnp.maximum(x @ w1 + b1, 0.0)
    logits = h @ w2 + b2
    lse = jax.scipy.special.logsumexp(logits, axis=-1)
    ref = jnp.mean(lse - logits[jnp.arange(B), label[:, 0]])

    # f32 operands, single-tile fast path (grid=(1,)) -> tight check.
    loss_f32 = span_cls_loss(acc, gyr, label, w1, b1, w2, b2,
                             operand_dtype=jnp.float32)
    jax.block_until_ready(loss_f32)
    assert jnp.allclose(loss_f32, ref, atol=1e-4, rtol=1e-4), (loss_f32, ref)

    # Default bf16 operand path (halved HBM bytes on the x stream) -> loose check.
    loss_bf16 = span_cls_loss(acc, gyr, label, w1, b1, w2, b2)
    jax.block_until_ready(loss_bf16)
    assert abs(float(loss_bf16) - float(ref)) < 0.1, (loss_bf16, ref)

    # Force a multi-tile grid (3 parallel tiles, per-tile partials) -> tight check.
    loss_tiled = span_cls_loss(acc, gyr, label, w1, b1, w2, b2,
                               operand_dtype=jnp.float32, tile_b=8)
    jax.block_until_ready(loss_tiled)
    assert jnp.allclose(loss_tiled, ref, atol=1e-4, rtol=1e-4), (loss_tiled, ref)

    print("KERNEL_OK")
</pallas_src>

<mosaic_0001>
module attributes {stable_mosaic.version = 11 : i64} {
  func.func @span_cls_kernel(%arg0: i32, %arg1: memref<24x48xf32, #tpu.memory_space<vmem>>, %arg2: memref<24x48xf32, #tpu.memory_space<vmem>>, %arg3: memref<48x128xf32, #tpu.memory_space<vmem>>, %arg4: memref<48x128xf32, #tpu.memory_space<vmem>>, %arg5: memref<1x128xf32, #tpu.memory_space<vmem>>, %arg6: memref<128x128xf32, #tpu.memory_space<vmem>>, %arg7: memref<1x128xf32, #tpu.memory_space<vmem>>, %arg8: memref<24x1xi32, #tpu.memory_space<vmem>>, %arg9: memref<1x128xf32, #tpu.memory_space<vmem>>) attributes {dimension_semantics = [#tpu.dimension_semantics<parallel>], iteration_bounds = array<i64: 1>, scalar_prefetch = 0 : i64, scratch_operands = 0 : i64, tpu.core_type = #tpu.core_type<tc>, window_params = [{transform_indices = @transform_0, window_bounds = array<i64: 24, 48>}, {transform_indices = @transform_1, window_bounds = array<i64: 24, 48>}, {pipeline_mode = #tpu.pipeline_mode<synchronous>, transform_indices = @transform_2, window_bounds = array<i64: 48, 128>}, {pipeline_mode = #tpu.pipeline_mode<synchronous>, transform_indices = @transform_3, window_bounds = array<i64: 48, 128>}, {pipeline_mode = #tpu.pipeline_mode<synchronous>, transform_indices = @transform_4, window_bounds = array<i64: 1, 128>}, {pipeline_mode = #tpu.pipeline_mode<synchronous>, transform_indices = @transform_5, window_bounds = array<i64: 128, 128>}, {pipeline_mode = #tpu.pipeline_mode<synchronous>, transform_indices = @transform_6, window_bounds = array<i64: 1, 128>}, {transform_indices = @transform_7, window_bounds = array<i64: 24, 1>}, {transform_indices = @transform_8, window_bounds = array<i64: 1, 128>}]} {
    %c0 = arith.constant 0 : index
    %c0_0 = arith.constant 0 : index
    %0 = vector.load %arg1[%c0, %c0_0] : memref<24x48xf32, #tpu.memory_space<vmem>>, vector<24x48xf32>
    %c0_1 = arith.constant 0 : index
    %c0_2 = arith.constant 0 : index
    %1 = vector.load %arg3[%c0_1, %c0_2] : memref<48x128xf32, #tpu.memory_space<vmem>>, vector<48x128xf32>
    %cst = arith.constant dense<0.000000e+00> : vector<24x128xf32>
    %2 = tpu.matmul %0, %1, %cst {dimension_numbers = #tpu.dot_dimension_numbers<[1], [0], [0], [1], [0, 0, 1, 1], [], []>} : vector<24x48xf32>, vector<48x128xf32>, vector<24x128xf32> -> vector<24x128xf32>
    %c0_3 = arith.constant 0 : index
    %c0_4 = arith.constant 0 : index
    %3 = vector.load %arg2[%c0_3, %c0_4] : memref<24x48xf32, #tpu.memory_space<vmem>>, vector<24x48xf32>
    %c0_5 = arith.constant 0 : index
    %c0_6 = arith.constant 0 : index
    %4 = vector.load %arg4[%c0_5, %c0_6] : memref<48x128xf32, #tpu.memory_space<vmem>>, vector<48x128xf32>
    %cst_7 = arith.constant dense<0.000000e+00> : vector<24x128xf32>
    %5 = tpu.matmul %3, %4, %cst_7 {dimension_numbers = #tpu.dot_dimension_numbers<[1], [0], [0], [1], [0, 0, 1, 1], [], []>} : vector<24x48xf32>, vector<48x128xf32>, vector<24x128xf32> -> vector<24x128xf32>
    %6 = arith.addf %2, %5 : vector<24x128xf32>
    %c0_8 = arith.constant 0 : index
    %c0_9 = arith.constant 0 : index
    %7 = vector.load %arg5[%c0_8, %c0_9] : memref<1x128xf32, #tpu.memory_space<vmem>>, vector<1x128xf32>
    %8 = vector.broadcast %7 : vector<1x128xf32> to vector<24x128xf32>
    %9 = arith.addf %6, %8 : vector<24x128xf32>
    %cst_10 = arith.constant 0.000000e+00 : f32
    %10 = vector.broadcast %cst_10 : f32 to vector<24x128xf32>
    %11 = arith.maximumf %9, %10 : vector<24x128xf32>
    %c0_11 = arith.constant 0 : index
    %c0_12 = arith.constant 0 : index
    %12 = vector.load %arg6[%c0_11, %c0_12] : memref<128x128xf32, #tpu.memory_space<vmem>>, vector<128x128xf32>
    %cst_13 = arith.constant dense<0.000000e+00> : vector<24x128xf32>
    %13 = tpu.matmul %11, %12, %cst_13 {dimension_numbers = #tpu.dot_dimension_numbers<[1], [0], [0], [1], [0, 0, 1, 1], [], []>} : vector<24x128xf32>, vector<128x128xf32>, vector<24x128xf32> -> vector<24x128xf32>
    %c0_14 = arith.constant 0 : index
    %c0_15 = arith.constant 0 : index
    %14 = vector.load %arg7[%c0_14, %c0_15] : memref<1x128xf32, #tpu.memory_space<vmem>>, vector<1x128xf32>
    %15 = vector.broadcast %14 : vector<1x128xf32> to vector<24x128xf32>
    %16 = arith.addf %13, %15 : vector<24x128xf32>
    %cst_16 = arith.constant dense<0xFF800000> : vector<24xf32>
    %17 = vector.multi_reduction <maximumf>, %16, %cst_16 [1] : vector<24x128xf32> to vector<24xf32>
    %18 = vector.shape_cast %17 : vector<24xf32> to vector<24x1xf32>
    %19 = vector.broadcast %18 : vector<24x1xf32> to vector<24x128xf32>
    %20 = arith.subf %16, %19 : vector<24x128xf32>
    %21 = math.exp %20 : vector<24x128xf32>
    %cst_17 = arith.constant dense<0.000000e+00> : vector<24xf32>
    %22 = vector.multi_reduction <add>, %21, %cst_17 [1] : vector<24x128xf32> to vector<24xf32>
    %23 = vector.shape_cast %22 : vector<24xf32> to vector<24x1xf32>
    %24 = math.log %23 : vector<24x1xf32>
    %25 = arith.addf %18, %24 : vector<24x1xf32>
    %26 = tpu.iota {dimensions = array<i32: 1>} : vector<24x128xi32>
    %c0_18 = arith.constant 0 : index
    %c0_19 = arith.constant 0 : index
    %27 = vector.load %arg8[%c0_18, %c0_19] : memref<24x1xi32, #tpu.memory_space<vmem>>, vector<24x1xi32>
    %28 = vector.broadcast %27 : vector<24x1xi32> to vector<24x128xi32>
    %29 = arith.cmpi eq, %26, %28 : vector<24x128xi32>
    %30 = arith.extui %29 : vector<24x128xi1> to vector<24x128xi32>
    %31 = arith.sitofp %30 : vector<24x128xi32> to vector<24x128xf32>
    %32 = arith.mulf %16, %31 : vector<24x128xf32>
    %cst_20 = arith.constant dense<0.000000e+00> : vector<24xf32>
    %33 = vector.multi_reduction <add>, %32, %cst_20 [1] : vector<24x128xf32> to vector<24xf32>
    %34 = vector.shape_cast %33 : vector<24xf32> to vector<24x1xf32>
    %35 = arith.subf %25, %34 : vector<24x1xf32>
    %36 = vector.shape_cast %35 : vector<24x1xf32> to vector<1x24x1xf32>
    %cst_21 = arith.constant dense<0.000000e+00> : vector<1xf32>
    %37 = vector.multi_reduction <add>, %36, %cst_21 [1, 2] : vector<1x24x1xf32> to vector<1xf32>
    %38 = vector.shape_cast %37 : vector<1xf32> to vector<1x1x1xf32>
    %39 = vector.extract %38[0, 0, 0] : f32 from vector<1x1x1xf32>
    %cst_22 = arith.constant 0.000000e+00 : f32
    %40 = vector.broadcast %cst_22 : f32 to vector<1x128xf32>
    %41 = vector.broadcast %39 : f32 to vector<1x128xf32>
    %42 = arith.addf %40, %41 : vector<1x128xf32>
    %c0_23 = arith.constant 0 : index
    %c0_24 = arith.constant 0 : index
    %43 = vector.load %arg9[%c0_23, %c0_24] : memref<1x128xf32, #tpu.memory_space<vmem>>, vector<1x128xf32>
    tpu.vector_store %arg9[%c0_23, %c0_24], %42 {strides = array<i32>} : memref<1x128xf32, #tpu.memory_space<vmem>>, vector<1x128xf32>,
    return
  }
  func.func @transform_0(%arg0: i32) -> (i32, i32) {
    %c0_i32 = arith.constant 0 : i32
    %c0_i32_0 = arith.constant 0 : i32
    return %arg0, %c0_i32 : i32, i32
  }
  func.func @transform_1(%arg0: i32) -> (i32, i32) {
    %c0_i32 = arith.constant 0 : i32
    %c0_i32_0 = arith.constant 0 : i32
    return %arg0, %c0_i32 : i32, i32
  }
  func.func @transform_2(%arg0: i32) -> (i32, i32) {
    %c0_i32 = arith.constant 0 : i32
    %c0_i32_0 = arith.constant 0 : i32
    %c0_i32_1 = arith.constant 0 : i32
    return %c0_i32, %c0_i32_0 : i32, i32
  }
  func.func @transform_3(%arg0: i32) -> (i32, i32) {
    %c0_i32 = arith.constant 0 : i32
    %c0_i32_0 = arith.constant 0 : i32
    %c0_i32_1 = arith.constant 0 : i32
    return %c0_i32, %c0_i32_0 : i32, i32
  }
  func.func @transform_4(%arg0: i32) -> (i32, i32) {
    %c0_i32 = arith.constant 0 : i32
    %c0_i32_0 = arith.constant 0 : i32
    %c0_i32_1 = arith.constant 0 : i32
    return %c0_i32, %c0_i32_0 : i32, i32
  }
  func.func @transform_5(%arg0: i32) -> (i32, i32) {
    %c0_i32 = arith.constant 0 : i32
    %c0_i32_0 = arith.constant 0 : i32
    %c0_i32_1 = arith.constant 0 : i32
    return %c0_i32, %c0_i32_0 : i32, i32
  }
  func.func @transform_6(%arg0: i32) -> (i32, i32) {
    %c0_i32 = arith.constant 0 : i32
    %c0_i32_0 = arith.constant 0 : i32
    %c0_i32_1 = arith.constant 0 : i32
    return %c0_i32, %c0_i32_0 : i32, i32
  }
  func.func @transform_7(%arg0: i32) -> (i32, i32) {
    %c0_i32 = arith.constant 0 : i32
    %c0_i32_0 = arith.constant 0 : i32
    return %arg0, %c0_i32 : i32, i32
  }
  func.func @transform_8(%arg0: i32) -> (i32, i32) {
    %c0_i32 = arith.constant 0 : i32
    %c0_i32_0 = arith.constant 0 : i32
    return %arg0, %c0_i32 : i32, i32
  }
}

</mosaic_0001>

<llo_original>
// kernel: tpu_custom_call.1
$region0: #{tpu_custom_call.1}
  #allocation0 [shape = 'u32[]', space=smem, size = 0x4, offset = 0x4, fixed_abs, tag = 'smem constant byte address 0x4 - core index']
  #allocation1 [shape = 'u32[144,128]{1,0:T(1,128)}', space=vmem, size = 0x12000, scoped, tag = 'internal scratch']
  %s0 = inlined_call_operand.vmem [shape: f32[24,48], index: 0, kind: input, shape index: {}]
  %s1 = inlined_call_operand.hbm [shape: f32[24,48], index: 1, kind: input, shape index: {}]
  %s2 = inlined_call_operand.hbm [shape: f32[48,128], index: 2, kind: input, shape index: {}]
  %s3 = inlined_call_operand.hbm [shape: f32[48,128], index: 3, kind: input, shape index: {}]
  %s4 = inlined_call_operand.vmem [shape: f32[1,128], index: 4, kind: input, shape index: {}]
  %s5 = inlined_call_operand.hbm [shape: f32[128,128], index: 5, kind: input, shape index: {}]
  %s6 = inlined_call_operand.vmem [shape: f32[1,128], index: 6, kind: input, shape index: {}]
  %s7 = inlined_call_operand.vmem [shape: s32[24,1], index: 7, kind: input, shape index: {}]
  %s8 = inlined_call_operand.hbm [shape: f32[1,128], index: 8, kind: output, shape index: {}]
  %s9 = sld [smem:[#allocation0]]
  $region58: #{tpu_custom_call.1} parent=0
    _
  %s11 = ssub.s32 1, %s9
  %s12 = scalar_select 0, %s11, %s9
  $region1: #{tpu_custom_call.1} parent=0
    #allocation2 [shape = 'u8[12288]{0}', space=vmem, size = 0x3000, scoped, tag = 'input window, operand 1, single buffered']
    #allocation3 [shape = 's32[1]{0}', space=sflag, size = 0x4, scoped, tag = 'scoped memory for tpu_custom_call.1']
    #allocation4 [shape = 's32[1]{0}', space=sflag, size = 0x4, scoped, tag = 'scoped memory for tpu_custom_call.1']
    #allocation5 [shape = 'u8[24576]{0}', space=vmem, size = 0x6000, scoped, tag = 'input window, operand 2, single buffered']
    #allocation6 [shape = 's32[1]{0}', space=sflag, size = 0x4, scoped, tag = 'scoped memory for tpu_custom_call.1']
    #allocation7 [shape = 'u8[24576]{0}', space=vmem, size = 0x6000, scoped, tag = 'input window, operand 3, single buffered']
    #allocation8 [shape = 'u8[65536]{0}', space=vmem, size = 0x10000, scoped, tag = 'input window, operand 5, single buffered']
    #allocation9 [shape = 's32[1]{0}', space=sflag, size = 0x4, scoped, tag = 'scoped memory for tpu_custom_call.1']
    #allocation10 [shape = 'u8[512]{0}', space=vmem, size = 0x400, scoped, tag = 'output window, operand 0, single buffered']
    %13 = vsyncpa [#allocation3], 0
    %14 = vsyncpa [#allocation6], 0
    %15 = vsyncpa [#allocation9], 0
    %16 = vsyncpa [#allocation4], 0
    // Predicated region
    $region2: #{tpu_custom_call.1} parent=1 // pred_check
      _
    $region3: #{tpu_custom_call.1} parent=1 // pred_check_branch
      %18 = sbr.rel (0) target = $region5
    $region4: #{tpu_custom_call.1} parent=1 // pred_region
      _
    $region5: #{tpu_custom_call.1} parent=1 // pred_fallthru
      _
    // Predicated region
    $region6: #{tpu_custom_call.1} parent=1 // pred_check
      _
    $region7: #{tpu_custom_call.1} parent=1 // pred_check_branch
      %20 = sbr.rel (0) target = $region9
    $region8: #{tpu_custom_call.1} parent=1 // pred_region
      %s22 = ssub.s32 384, 384
      %23 = vsyncadd [#allocation3], %s22
      %s24 = sshll.u32 [#allocation2], 4
      %s25 = int_to_ptr.vmem [resolvable:$true] %s24
      %30 = dma.hbm_to_vmem [thread:$0]  %s1, 384, %s25, [#allocation3], 128, 128, 8
    $region9: #{tpu_custom_call.1} parent=1 // pred_fallthru
      _
    // Predicated region
    $region10: #{tpu_custom_call.1} parent=1 // pred_check
      _
    $region11: #{tpu_custom_call.1} parent=1 // pred_check_branch
      %32 = sbr.rel (0) target = $region13
    $region12: #{tpu_custom_call.1} parent=1 // pred_region
      %s34 = ssub.s32 768, 768
      %35 = vsyncadd [#allocation6], %s34
      %s36 = sshll.u32 [#allocation5], 4
      %s37 = int_to_ptr.vmem [resolvable:$true] %s36
      %42 = dma.hbm_to_vmem [thread:$0]  %s2, 768, %s37, [#allocation6], 128, 128, 8
    $region13: #{tpu_custom_call.1} parent=1 // pred_fallthru
      _
    // Predicated region
    $region14: #{tpu_custom_call.1} parent=1 // pred_check
      _
    $region15: #{tpu_custom_call.1} parent=1 // pred_check_branch
      %44 = sbr.rel (0) target = $region17
    $region16: #{tpu_custom_call.1} parent=1 // pred_region
      %s46 = ssub.s32 768, 768
      %47 = vsyncadd [#allocation6], %s46
      %s48 = sshll.u32 [#allocation7], 4
      %s49 = int_to_ptr.vmem [resolvable:$true] %s48
      %54 = dma.hbm_to_vmem [thread:$0]  %s3, 768, %s49, [#allocation6], 128, 128, 8
    $region17: #{tpu_custom_call.1} parent=1 // pred_fallthru
      _
    // Predicated region
    $region18: #{tpu_custom_call.1} parent=1 // pred_check
      _
    $region19: #{tpu_custom_call.1} parent=1 // pred_check_branch
      %56 = sbr.rel (0) target = $region21
    $region20: #{tpu_custom_call.1} parent=1 // pred_region
      _
    $region21: #{tpu_custom_call.1} parent=1 // pred_fallthru
      _
    // Predicated region
    $region22: #{tpu_custom_call.1} parent=1 // pred_check
      _
    $region23: #{tpu_custom_call.1} parent=1 // pred_check_branch
      %58 = sbr.rel (0) target = $region25
    $region24: #{tpu_custom_call.1} parent=1 // pred_region
      %s60 = ssub.s32 2048, 2048
      %61 = vsyncadd [#allocation9], %s60
      %s62 = sshll.u32 [#allocation8], 4
      %s63 = int_to_ptr.vmem [resolvable:$true] %s62
      %68 = dma.hbm_to_vmem [thread:$0]  %s5, 2048, %s63, [#allocation9], 128, 128, 8
    $region25: #{tpu_custom_call.1} parent=1 // pred_fallthru
      _
    // Predicated region
    $region26: #{tpu_custom_call.1} parent=1 // pred_check
      _
    $region27: #{tpu_custom_call.1} parent=1 // pred_check_branch
      %70 = sbr.rel (0) target = $region29
    $region28: #{tpu_custom_call.1} parent=1 // pred_region
      _
    $region29: #{tpu_custom_call.1} parent=1 // pred_fallthru
      _
    // Predicated region
    $region30: #{tpu_custom_call.1} parent=1 // pred_check
      _
    $region31: #{tpu_custom_call.1} parent=1 // pred_check_branch
      %72 = sbr.rel (0) target = $region33
    $region32: #{tpu_custom_call.1} parent=1 // pred_region
      _
    $region33: #{tpu_custom_call.1} parent=1 // pred_fallthru
      _
    // Predicated region
    $region34: #{tpu_custom_call.1} parent=1 // pred_check
      _
    $region35: #{tpu_custom_call.1} parent=1 // pred_check_branch
      %74 = sbr.rel (0) target = $region37
    $region36: #{tpu_custom_call.1} parent=1 // pred_region
      %75 = dma.done [#allocation3], 384
    $region37: #{tpu_custom_call.1} parent=1 // pred_fallthru
      _
    // Predicated region
    $region38: #{tpu_custom_call.1} parent=1 // pred_check
      _
    $region39: #{tpu_custom_call.1} parent=1 // pred_check_branch
      %77 = sbr.rel (0) target = $region41
    $region40: #{tpu_custom_call.1} parent=1 // pred_region
      %78 = dma.done [#allocation6], 768
    $region41: #{tpu_custom_call.1} parent=1 // pred_fallthru
      _
    // Predicated region
    $region42: #{tpu_custom_call.1} parent=1 // pred_check
      _
    $region43: #{tpu_custom_call.1} parent=1 // pred_check_branch
      %80 = sbr.rel (0) target = $region45
    $region44: #{tpu_custom_call.1} parent=1 // pred_region
      %81 = dma.done [#allocation6], 768
    $region45: #{tpu_custom_call.1} parent=1 // pred_fallthru
      _
    // Predicated region
    $region46: #{tpu_custom_call.1} parent=1 // pred_check
      _
    $region47: #{tpu_custom_call.1} parent=1 // pred_check_branch
      %83 = sbr.rel (0) target = $region49
    $region48: #{tpu_custom_call.1} parent=1 // pred_region
      %84 = dma.done [#allocation9], 2048
    $region49: #{tpu_custom_call.1} parent=1 // pred_fallthru
      _
    %v85 = vld [vmem:[%s0] sm:$0xff]
    %v86 = vld [vmem:[%s0 + $0x8] sm:$0xff]
    %v87 = vld [vmem:[%s0 + $0x10] sm:$0xff]
    %v88 = vld [vmem:[#allocation5] sm:$0xff]
    %v89 = vld [vmem:[#allocation5 + $0x8] sm:$0xff]
    %v90 = vld [vmem:[#allocation5 + $0x10] sm:$0xff]
    %v91 = vld [vmem:[#allocation5 + $0x18] sm:$0xff]
    %v92 = vld [vmem:[#allocation5 + $0x20] sm:$0xff]
    %v93 = vld [vmem:[#allocation5 + $0x28] sm:$0xff]
    %v94 = vld [vmem:[#allocation2] sm:$0xff]
    %v95 = vld [vmem:[#allocation2 + $0x8] sm:$0xff]
    %v96 = vld [vmem:[#allocation2 + $0x10] sm:$0xff]
    %v97 = vld [vmem:[#allocation7] sm:$0xff]
    %v98 = vld [vmem:[#allocation7 + $0x8] sm:$0xff]
    %v99 = vld [vmem:[#allocation7 + $0x10] sm:$0xff]
    %v100 = vld [vmem:[#allocation7 + $0x18] sm:$0xff]
    %v101 = vld [vmem:[#allocation7 + $0x20] sm:$0xff]
    %v102 = vld [vmem:[#allocation7 + $0x28] sm:$0xff]
    %vm103 = vcmask 392192
    %v105 = vsel %vm103, %v94, 0
    %v108 = vsel %vm103, %v95, 0
    %v111 = vsel %vm103, %v96, 0
    %113 = vmatprep.subr.mxu0 0.0
    %114 = vmatpush1.msra.mxu0 0.0
    %115 = vmatprep.subr.mxu0 0.0
    %116 = vmatpush1.msra.mxu0 0.0
    %117 = vmatprep.subr.mxu0 0.0
    %118 = vmatpush1.msra.mxu0 0.0
    %119 = vmatprep.subr.mxu0 0.0
    %120 = vmatpush1.msra.mxu0 0.0
    %121 = vmatprep.subr.mxu0 0.0
    %122 = vmatpush1.msra.mxu0 0.0
    %123 = vmatprep.subr.mxu0 0.0
    %124 = vmatpush1.msra.mxu0 0.0
    %125 = vmatprep.subr.mxu0 0.0
    %126 = vmatpush1.msra.mxu0 0.0
    %127 = vmatprep.subr.mxu0 0.0
    %128 = vmatpush1.msra.mxu0 0.0
    %129 = vmatprep.subr.mxu0 0.0
    %130 = vmatpush1.msra.mxu0 0.0
    %131 = vmatprep.subr.mxu0 0.0
    %132 = vmatpush1.msra.mxu0 0.0
    %133 = vmatprep.subr.mxu0 0.0
    %134 = vmatpush1.msra.mxu0 %v102
    %135 = vmatprep.subr.mxu0 0.0
    %136 = vmatpush1.msra.mxu0 %v101
    %137 = vmatprep.subr.mxu0 0.0
    %138 = vmatpush1.msra.mxu0 %v100
    %139 = vmatprep.subr.mxu0 0.0
    %140 = vmatpush1.msra.mxu0 %v99
    %141 = vmatprep.subr.mxu0 0.0
    %142 = vmatpush1.msra.mxu0 %v98
    %143 = vmatprep.subr.mxu0 0.0
    %144 = vmatpush1.msra.mxu0 %v97
    %145 = vmatprep.subr.mxu0 0.0
    %146 = vmatpush2.msra.mxu0 0.0
    %147 = vmatprep.subr.mxu0 0.0
    %148 = vmatpush2.msra.mxu0 0.0
    %149 = vmatprep.subr.mxu0 0.0
    %150 = vmatpush2.msra.mxu0 0.0
    %151 = vmatprep.subr.mxu0 0.0
    %152 = vmatpush2.msra.mxu0 0.0
    %153 = vmatprep.subr.mxu0 0.0
    %154 = vmatpush2.msra.mxu0 0.0
    %155 = vmatprep.subr.mxu0 0.0
    %156 = vmatpush2.msra.mxu0 0.0
    %157 = vmatprep.subr.mxu0 0.0
    %158 = vmatpush2.msra.mxu0 0.0
    %159 = vmatprep.subr.mxu0 0.0
    %160 = vmatpush2.msra.mxu0 0.0
    %161 = vmatprep.subr.mxu0 0.0
    %162 = vmatpush2.msra.mxu0 0.0
    %163 = vmatprep.subr.mxu0 0.0
    %164 = vmatpush2.msra.mxu0 0.0
    %165 = vmatprep.subr.mxu0 0.0
    %166 = vmatpush2.msra.mxu0 0.0
    %167 = vmatprep.subr.mxu0 0.0
    %168 = vmatpush2.msra.mxu0 0.0
    %169 = vmatprep.subr.mxu0 0.0
    %170 = vmatpush2.msra.mxu0 0.0
    %171 = vmatprep.subr.mxu0 0.0
    %172 = vmatpush2.msra.mxu0 0.0
    %173 = vmatprep.subr.mxu0 0.0
    %174 = vmatpush2.msra.mxu0 0.0
    %175 = vmatprep.subr.mxu0 0.0
    %176 = vmatpush2.msra.mxu0 0.0
    %177 = vmatprep.mubr.f32.mxu0 0.0
    %178 = vmatmul.mubr.f32.gmra.mxu0 %v105
    %v179 = vpop.f32.mrf.mxu0
    %v180 = vadd.f32 0.0, %v179
    %v181 = vpop.f32.mrf.mxu0
    %182 = vmatprep.mubr.f32.mxu0 0.0
    %183 = vmatmul.mubr.f32.gmra.mxu0 %v108
    %v184 = vpop.f32.mrf.mxu0
    %v185 = vadd.f32 0.0, %v184
    %v186 = vpop.f32.mrf.mxu0
    %187 = vmatprep.mubr.f32.mxu0 0.0
    %188 = vmatmul.mubr.f32.gmra.mxu0 %v111
    %v189 = vpop.f32.mrf.mxu0
    %v190 = vadd.f32 0.0, %v189
    %v191 = vpop.f32.mrf.mxu0
    %192 = vdwg.mxu0
    %v194 = vsel %vm103, %v85, 0
    %v197 = vsel %vm103, %v86, 0
    %v200 = vsel %vm103, %v87, 0
    %202 = vmatprep.subr.mxu0 0.0
    %203 = vmatpush1.msra.mxu0 0.0
    %204 = vmatprep.subr.mxu0 0.0
    %205 = vmatpush1.msra.mxu0 0.0
    %206 = vmatprep.subr.mxu0 0.0
    %207 = vmatpush1.msra.mxu0 0.0
    %208 = vmatprep.subr.mxu0 0.0
    %209 = vmatpush1.msra.mxu0 0.0
    %210 = vmatprep.subr.mxu0 0.0
    %211 = vmatpush1.msra.mxu0 0.0
    %212 = vmatprep.subr.mxu0 0.0
    %213 = vmatpush1.msra.mxu0 0.0
    %214 = vmatprep.subr.mxu0 0.0
    %215 = vmatpush1.msra.mxu0 0.0
    %216 = vmatprep.subr.mxu0 0.0
    %217 = vmatpush1.msra.mxu0 0.0
    %218 = vmatprep.subr.mxu0 0.0
    %219 = vmatpush1.msra.mxu0 0.0
    %220 = vmatprep.subr.mxu0 0.0
    %221 = vmatpush1.msra.mxu0 0.0
    %222 = vmatprep.subr.mxu0 0.0
    %223 = vmatpush1.msra.mxu0 %v93
    %224 = vmatprep.subr.mxu0 0.0
    %225 = vmatpush1.msra.mxu0 %v92
    %226 = vmatprep.subr.mxu0 0.0
    %227 = vmatpush1.msra.mxu0 %v91
    %228 = vmatprep.subr.mxu0 0.0
    %229 = vmatpush1.msra.mxu0 %v90
    %230 = vmatprep.subr.mxu0 0.0
    %231 = vmatpush1.msra.mxu0 %v89
    %232 = vmatprep.subr.mxu0 0.0
    %233 = vmatpush1.msra.mxu0 %v88
    %234 = vmatprep.subr.mxu0 0.0
    %235 = vmatpush2.msra.mxu0 0.0
    %236 = vmatprep.subr.mxu0 0.0
    %237 = vmatpush2.msra.mxu0 0.0
    %238 = vmatprep.subr.mxu0 0.0
    %239 = vmatpush2.msra.mxu0 0.0
    %240 = vmatprep.subr.mxu0 0.0
    %241 = vmatpush2.msra.mxu0 0.0
    %242 = vmatprep.subr.mxu0 0.0
    %243 = vmatpush2.msra.mxu0 0.0
    %244 = vmatprep.subr.mxu0 0.0
    %245 = vmatpush2.msra.mxu0 0.0
    %246 = vmatprep.subr.mxu0 0.0
    %247 = vmatpush2.msra.mxu0 0.0
    %248 = vmatprep.subr.mxu0 0.0
    %249 = vmatpush2.msra.mxu0 0.0
    %250 = vmatprep.subr.mxu0 0.0
    %251 = vmatpush2.msra.mxu0 0.0
    %252 = vmatprep.subr.mxu0 0.0
    %253 = vmatpush2.msra.mxu0 0.0
    %254 = vmatprep.subr.mxu0 0.0
    %255 = vmatpush2.msra.mxu0 0.0
    %256 = vmatprep.subr.mxu0 0.0
    %257 = vmatpush2.msra.mxu0 0.0
    %258 = vmatprep.subr.mxu0 0.0
    %259 = vmatpush2.msra.mxu0 0.0
    %260 = vmatprep.subr.mxu0 0.0
    %261 = vmatpush2.msra.mxu0 0.0
    %262 = vmatprep.subr.mxu0 0.0
    %263 = vmatpush2.msra.mxu0 0.0
    %264 = vmatprep.subr.mxu0 0.0
    %265 = vmatpush2.msra.mxu0 0.0
    %266 = vmatprep.mubr.f32.mxu0 0.0
    %267 = vmatmul.mubr.f32.gmra.mxu0 %v194
    %v268 = vpop.f32.mrf.mxu0
    %v269 = vadd.f32 %v180, %v268
    %v270 = vpop.f32.mrf.mxu0
    %271 = vmatprep.mubr.f32.mxu0 0.0
    %272 = vmatmul.mubr.f32.gmra.mxu0 %v197
    %v273 = vpop.f32.mrf.mxu0
    %v274 = vadd.f32 %v185, %v273
    %v275 = vpop.f32.mrf.mxu0
    %276 = vmatprep.mubr.f32.mxu0 0.0
    %277 = vmatmul.mubr.f32.gmra.mxu0 %v200
    %v278 = vpop.f32.mrf.mxu0
    %v279 = vadd.f32 %v190, %v278
    %v280 = vpop.f32.mrf.mxu0
    %281 = vdwg.mxu0
    %v282 = vld [vmem:[%s4] sm:$0x1]
    %v284 = vlaneseq
    %v285 = vshrl.u32 %v284, 7
    %v286 = vsub.s32 0, %v285
    %v287 = vrot.slane %v282, %v286
    %v289 = vadd.f32 %v269, %v287
    %v290 = vadd.f32 %v274, %v287
    %v291 = vadd.f32 %v279, %v287
    %v292 = vmax.f32 %v289, 0.0
    %v293 = vmax.f32 %v290, 0.0
    %v294 = vmax.f32 %v291, 0.0
    %v295 = vld [vmem:[#allocation8] sm:$0xff]
    %v296 = vld [vmem:[#allocation8 + $0x8] sm:$0xff]
    %v297 = vld [vmem:[#allocation8 + $0x10] sm:$0xff]
    %v298 = vld [vmem:[#allocation8 + $0x18] sm:$0xff]
    %v299 = vld [vmem:[#allocation8 + $0x20] sm:$0xff]
    %v300 = vld [vmem:[#allocation8 + $0x28] sm:$0xff]
    %v301 = vld [vmem:[#allocation8 + $0x30] sm:$0xff]
    %v302 = vld [vmem:[#allocation8 + $0x38] sm:$0xff]
    %v303 = vld [vmem:[#allocation8 + $0x40] sm:$0xff]
    %v304 = vld [vmem:[#allocation8 + $0x48] sm:$0xff]
    %v305 = vld [vmem:[#allocation8 + $0x50] sm:$0xff]
    %v306 = vld [vmem:[#allocation8 + $0x58] sm:$0xff]
    %v307 = vld [vmem:[#allocation8 + $0x60] sm:$0xff]
    %v308 = vld [vmem:[#allocation8 + $0x68] sm:$0xff]
    %v309 = vld [vmem:[#allocation8 + $0x70] sm:$0xff]
    %v310 = vld [vmem:[#allocation8 + $0x78] sm:$0xff]
    %v311 = vld [vmem:[%s6] sm:$0x1]
    %v313 = vlaneseq
    %v314 = vshrl.u32 %v313, 7
    %v315 = vsub.s32 0, %v314
    %v316 = vrot.slane %v311, %v315
    %318 = vmatprep.subr.mxu0 0.0
    %319 = vmatpush1.msra.mxu0 %v310
    %320 = vmatprep.subr.mxu0 0.0
    %321 = vmatpush1.msra.mxu0 %v309
    %322 = vmatprep.subr.mxu0 0.0
    %323 = vmatpush1.msra.mxu0 %v308
    %324 = vmatprep.subr.mxu0 0.0
    %325 = vmatpush1.msra.mxu0 %v307
    %326 = vmatprep.subr.mxu0 0.0
    %327 = vmatpush1.msra.mxu0 %v306
    %328 = vmatprep.subr.mxu0 0.0
    %329 = vmatpush1.msra.mxu0 %v305
    %330 = vmatprep.subr.mxu0 0.0
    %331 = vmatpush1.msra.mxu0 %v304
    %332 = vmatprep.subr.mxu0 0.0
    %333 = vmatpush1.msra.mxu0 %v303
    %334 = vmatprep.subr.mxu0 0.0
    %335 = vmatpush1.msra.mxu0 %v302
    %336 = vmatprep.subr.mxu0 0.0
    %337 = vmatpush1.msra.mxu0 %v301
    %338 = vmatprep.subr.mxu0 0.0
    %339 = vmatpush1.msra.mxu0 %v300
    %340 = vmatprep.subr.mxu0 0.0
    %341 = vmatpush1.msra.mxu0 %v299
    %342 = vmatprep.subr.mxu0 0.0
    %343 = vmatpush1.msra.mxu0 %v298
    %344 = vmatprep.subr.mxu0 0.0
    %345 = vmatpush1.msra.mxu0 %v297
    %346 = vmatprep.subr.mxu0 0.0
    %347 = vmatpush1.msra.mxu0 %v296
    %348 = vmatprep.subr.mxu0 0.0
    %349 = vmatpush1.msra.mxu0 %v295
    %350 = vmatprep.subr.mxu0 0.0
    %351 = vmatpush2.msra.mxu0 0.0
    %352 = vmatprep.subr.mxu0 0.0
    %353 = vmatpush2.msra.mxu0 0.0
    %354 = vmatprep.subr.mxu0 0.0
    %355 = vmatpush2.msra.mxu0 0.0
    %356 = vmatprep.subr.mxu0 0.0
    %357 = vmatpush2.msra.mxu0 0.0
    %358 = vmatprep.subr.mxu0 0.0
    %359 = vmatpush2.msra.mxu0 0.0
    %360 = vmatprep.subr.mxu0 0.0
    %361 = vmatpush2.msra.mxu0 0.0
    %362 = vmatprep.subr.mxu0 0.0
    %363 = vmatpush2.msra.mxu0 0.0
    %364 = vmatprep.subr.mxu0 0.0
    %365 = vmatpush2.msra.mxu0 0.0
    %366 = vmatprep.subr.mxu0 0.0
    %367 = vmatpush2.msra.mxu0 0.0
    %368 = vmatprep.subr.mxu0 0.0
    %369 = vmatpush2.msra.mxu0 0.0
    %370 = vmatprep.subr.mxu0 0.0
    %371 = vmatpush2.msra.mxu0 0.0
    %372 = vmatprep.subr.mxu0 0.0
    %373 = vmatpush2.msra.mxu0 0.0
    %374 = vmatprep.subr.mxu0 0.0
    %375 = vmatpush2.msra.mxu0 0.0
    %376 = vmatprep.subr.mxu0 0.0
    %377 = vmatpush2.msra.mxu0 0.0
    %378 = vmatprep.subr.mxu0 0.0
    %379 = vmatpush2.msra.mxu0 0.0
    %380 = vmatprep.subr.mxu0 0.0
    %381 = vmatpush2.msra.mxu0 0.0
    %382 = vmatprep.mubr.f32.mxu0 0.0
    %383 = vmatmul.mubr.f32.gmra.mxu0 %v292
    %v384 = vpop.f32.mrf.mxu0
    %v385 = vadd.f32 %v316, %v384
    %v386 = vpop.f32.mrf.mxu0
    %387 = vmatprep.mubr.f32.mxu0 0.0
    %388 = vmatmul.mubr.f32.gmra.mxu0 %v293
    %v389 = vpop.f32.mrf.mxu0
    %v390 = vadd.f32 %v316, %v389
    %v391 = vpop.f32.mrf.mxu0
    %392 = vmatprep.mubr.f32.mxu0 0.0
    %393 = vmatmul.mubr.f32.gmra.mxu0 %v294
    %v394 = vpop.f32.mrf.mxu0
    %v395 = vadd.f32 %v316, %v394
    %v396 = vpop.f32.mrf.mxu0
    %397 = vdwg.mxu0
    %398 = vmax.xlane.f32.xlu0 %v385
    %v399 = vpop.xlane.xlu0 %398
    %400 = vmax.xlane.f32.xlu0 %v390
    %v401 = vpop.xlane.xlu0 %400
    %402 = vmax.xlane.f32.xlu0 %v395
    %v403 = vpop.xlane.xlu0 %402
    %v404 = vsub.f32 %v385, %v399
    %v405 = vsub.f32 %v390, %v401
    %v406 = vsub.f32 %v395, %v403
    %v407 = vmul.f32 %v404, 1.442695
    %v408 = vpow.pop %v407
    %v409 = vmul.f32 %v405, 1.442695
    %v410 = vpow.pop %v409
    %v411 = vmul.f32 %v406, 1.442695
    %v412 = vpow.pop %v411
    %413 = vadd.xlane.f32.xlu0 %v408
    %v414 = vpop.xlane.xlu0 %413
    %415 = vadd.xlane.f32.xlu0 %v410
    %v416 = vpop.xlane.xlu0 %415
    %417 = vadd.xlane.f32.xlu0 %v412
    %v418 = vpop.xlane.xlu0 %417
    %v419 = vlog2.pop %v414
    %v420 = vmul.f32 %v419, 0.6931472
    %v421 = vlog2.pop %v416
    %v422 = vmul.f32 %v421, 0.6931472
    %v423 = vlog2.pop %v418
    %v424 = vmul.f32 %v423, 0.6931472
    %v425 = vadd.f32 %v399, %v420
    %v426 = vadd.f32 %v401, %v422
    %v427 = vadd.f32 %v403, %v424
    %v428 = vlaneseq
    %v429 = vand.u32 %v428, 127
    %v430 = vld [vmem:[%s7] sm:$0xff]
    %v431 = vld [vmem:[%s7 + $0x8] sm:$0xff]
    %v432 = vld [vmem:[%s7 + $0x10] sm:$0xff]
    %433 = vset.pattern.permute.xlu0 0
    %434 = vperm.xlu0 %433, %v430
    %v435 = vpop.permute.xlu0 %434
    %436 = vset.pattern.permute.xlu0 0
    %437 = vperm.xlu0 %436, %v431
    %v438 = vpop.permute.xlu0 %437
    %439 = vset.pattern.permute.xlu0 0
    %440 = vperm.xlu0 %439, %v432
    %v441 = vpop.permute.xlu0 %440
    %vm442 = vcmp.eq.s32.totalorder %v429, %v435
    %vm443 = vcmp.eq.s32.totalorder %v429, %v438
    %vm444 = vcmp.eq.s32.totalorder %v429, %v441
    %v445 = vsel %vm442, 1, 0
    %v446 = vsel %vm443, 1, 0
    %v447 = vsel %vm444, 1, 0
    %v448 = vcvt.s32.f32 %v445
    %v449 = vcvt.s32.f32 %v446
    %v450 = vcvt.s32.f32 %v447
    %v451 = vmul.f32 %v385, %v448
    %v452 = vmul.f32 %v390, %v449
    %v453 = vmul.f32 %v395, %v450
    %454 = vadd.xlane.f32.xlu0 %v451
    %v455 = vpop.xlane.xlu0 %454
    %456 = vadd.xlane.f32.xlu0 %v452
    %v457 = vpop.xlane.xlu0 %456
    %458 = vadd.xlane.f32.xlu0 %v453
    %v459 = vpop.xlane.xlu0 %458
    %v460 = vsub.f32 %v425, %v455
    %v461 = vsub.f32 %v426, %v457
    %v462 = vsub.f32 %v427, %v459
    %vm463 = vcmask 7168
    %v464 = vsel %vm463, %v460, 0.0
    %v465 = vsel %vm463, %v461, 0.0
    %v466 = vadd.f32 %v464, %v465
    %v467 = vsel %vm463, %v462, 0.0
    %v468 = vadd.f32 %v466, %v467
    %469 = vadd.xlane.f32.xlu0 %v468
    %v470 = vpop.xlane.xlu0 %469
    %v471 = vrot.slane %v470, 4
    %v472 = vadd.f32 %v470, %v471
    %v473 = vrot.slane %v472, 2
    %v474 = vadd.f32 %v472, %v473
    %v475 = vrot.slane %v474, 1
    %v476 = vadd.f32 %v474, %v475
    %s477 = vtos %v476
    %v478 = vstv %s477
    %v479 = vadd.f32 %v478, 0.0
    %480 = vst [vmem:[#allocation10] sm:$0x1] %v479
    // Predicated region
    $region50: #{tpu_custom_call.1} parent=1 // pred_check
      _
    $region51: #{tpu_custom_call.1} parent=1 // pred_check_branch
      %482 = sbr.rel (0) target = $region53
    $region52: #{tpu_custom_call.1} parent=1 // pred_region
      %s484 = ssub.s32 16, 16
      %485 = vsyncadd [#allocation4], %s484
      %s487 = sshll.u32 [#allocation10], 4
      %s488 = int_to_ptr.vmem [resolvable:$true] %s487
      %490 = dma.vmem_to_hbm [thread:$0]  %s488, 16, %s8, [#allocation4]
    $region53: #{tpu_custom_call.1} parent=1 // pred_fallthru
      _
    // Predicated region
    $region54: #{tpu_custom_call.1} parent=1 // pred_check
      _
    $region55: #{tpu_custom_call.1} parent=1 // pred_check_branch
      %492 = sbr.rel (0) target = $region57
    $region56: #{tpu_custom_call.1} parent=1 // pred_region
      %493 = dma.done [#allocation4], 16
    $region57: #{tpu_custom_call.1} parent=1 // pred_fallthru
      _
    %494 = vsyncpa [#allocation3], 1
    %495 = vsyncpa [#allocation6], 1
    %496 = vsyncpa [#allocation9], 1
    %497 = vsyncpa [#allocation4], 1

</llo_original>
